<compile_context>
chip_gen: v7x
topology: tpu7x:2x2x1
jax: 0.10.0
libtpu: 0.0.40
codegen_flags: <defaults>
</compile_context>

<pallas_src>
import jax
import jax.numpy as jnp
from jax.experimental import pallas as pl
from jax.experimental.pallas import tpu as pltpu


def _round_up(a, b):
    return (a + b - 1) // b * b


def _vmem_capacity_bytes():
    try:
        return int(pltpu.get_tpu_info().vmem_capacity_bytes)
    except Exception:
        return 64 * 1024 * 1024  # conservative (v7x per-TensorCore)


def _choose_tm(M, tile_m):
    """Balanced M tile: <= tile_m rows, >= 2 tiles when M > 8, small pad waste."""
    n_tiles = max(1, pl.cdiv(M, tile_m))
    if n_tiles == 1 and M > 8:
        n_tiles = 2                      # keep both v7x TensorCores busy
    tm = _round_up(pl.cdiv(M, n_tiles), 8)
    return max(8, min(tm, tile_m))


# --------------------------------------------------------------------------- #
# Kernels
# --------------------------------------------------------------------------- #
def _adapter_resident_kernel(x_ref, mask_ref, remb_ref, w_ref, b_ref, o_ref):
    # x_ref:    (tm, H_pad)    f32   input rows (full hidden)
    # mask_ref: (tm, 1)        f32   per-row bernoulli mask (1.0 -> use embedding)
    # remb_ref: (1, H_pad)     f32   precomputed emb @ W + b
    # w_ref:    (H_pad, H_pad) bf16  VMEM-resident weight (in, out)
    # b_ref:    (1, H_pad)     f32   bias
    # o_ref:    (tm, H_pad)    f32   output tile
    y = jnp.dot(x_ref[...].astype(jnp.bfloat16), w_ref[...],
                preferred_element_type=jnp.float32) + b_ref[...]
    o_ref[...] = jnp.where(mask_ref[...] > 0.5, remb_ref[...], y).astype(o_ref.dtype)


def _adapter_tiled_kernel(x_ref, mask_ref, remb_ref, w_ref, b_ref, o_ref):
    # x_ref:    (tm, th) f32   K-slice of the input rows
    # mask_ref: (tm, 1)  f32   per-row mask
    # remb_ref: (1, th)  f32   N-slice of precomputed emb @ W + b
    # w_ref:    (th, th) bf16  weight tile (in, out)
    # b_ref:    (1, th)  f32   N-slice of bias
    # o_ref:    (tm, th) f32   output tile; VMEM-resident across the K axis
    k = pl.program_id(2)

    @pl.when(k == 0)
    def _init():
        o_ref[...] = jnp.broadcast_to(b_ref[...], o_ref.shape).astype(o_ref.dtype)

    o_ref[...] += jnp.dot(x_ref[...].astype(jnp.bfloat16), w_ref[...],
                          preferred_element_type=jnp.float32)

    @pl.when(k == pl.num_programs(2) - 1)
    def _finalize():
        o_ref[...] = jnp.where(mask_ref[...] > 0.5, remb_ref[...], o_ref[...])


# --------------------------------------------------------------------------- #
# Host wrapper
# --------------------------------------------------------------------------- #
def waveform_adapter_forward(x, mask, row_emb_p, weight_p_bf16, bias_p,
                             *, tile_m=512, tile_h=512, force_tiled=False):
    """x: (B, T, H) f32; mask: (B, T) {0,1} floats.

    weight_p_bf16: (H_pad, H_pad) bf16 stored (in, out) == PyTorch weight.T, zero-padded.
    row_emb_p / bias_p: (1, H_pad) f32 (row_emb_p = bf16(emb) @ bf16(W) + b), zero-padded.
    """
    B, T, H = x.shape
    M = B * T
    H_pad = weight_p_bf16.shape[1]                     # multiple of 128

    tm = _choose_tm(M, tile_m)
    M_pad = _round_up(M, tm)

    x2 = jnp.pad(x.reshape(M, H), ((0, M_pad - M), (0, H_pad - H)))
    mask2 = jnp.pad(mask.reshape(M, 1).astype(jnp.float32),
                    ((0, M_pad - M), (0, 0)))

    vmem_cap = _vmem_capacity_bytes()
    budget = int(0.6 * vmem_cap)                       # headroom for surrounding fusions

    # Working set of the weight-resident path (weight counted double-buffered).
    ws_resident = (2 * H_pad * H_pad * 2               # bf16 weight buffers
                   + 4 * tm * H_pad * 4                # x + out double buffers (f32)
                   + 2 * tm * 4 + 4 * H_pad * 4        # mask / bias / row_emb
                   + (2 << 20))                        # slack
    use_resident = (not force_tiled) and (ws_resident <= budget)

    if use_resident:
        grid = (M_pad // tm,)
        cost = pl.CostEstimate(
            flops=2 * M_pad * H_pad * H_pad,
            transcendentals=0,
            bytes_accessed=int(2 * M_pad * H_pad * 4   # x in + out (each read/written once)
                               + H_pad * H_pad * 2     # bf16 weight read once
                               + M_pad * 4 + 2 * H_pad * 4))
        out = pl.pallas_call(
            _adapter_resident_kernel,
            out_shape=jax.ShapeDtypeStruct((M_pad, H_pad), x.dtype),
            grid_spec=pltpu.PrefetchScalarGridSpec(
                num_scalar_prefetch=0,
                grid=grid,
                in_specs=[
                    pl.BlockSpec((tm, H_pad), lambda i: (i, 0)),      # x
                    pl.BlockSpec((tm, 1), lambda i: (i, 0)),          # mask
                    pl.BlockSpec((1, H_pad), lambda i: (0, 0)),       # row_emb
                    pl.BlockSpec((H_pad, H_pad), lambda i: (0, 0)),   # weight (resident)
                    pl.BlockSpec((1, H_pad), lambda i: (0, 0)),       # bias
                ],
                out_specs=pl.BlockSpec((tm, H_pad), lambda i: (i, 0)),
            ),
            compiler_params=pltpu.CompilerParams(
                dimension_semantics=("parallel",),
                vmem_limit_bytes=int(min(ws_resident + (8 << 20), (vmem_cap * 3) // 4)),
            ),
            cost_estimate=cost,
        )(x2, mask2, row_emb_p, weight_p_bf16, bias_p)
        return out[:M, :H].reshape(B, T, H)

    # ----- tiled fallback for very large hidden sizes -------------------------------
    th = min(tile_h, H_pad)                       # H_pad is a multiple of 128
    Ht = _round_up(H_pad, th)                     # pad hidden up to a tile multiple
    x2 = jnp.pad(x2, ((0, 0), (0, Ht - H_pad)))
    w2 = jnp.pad(weight_p_bf16, ((0, Ht - H_pad), (0, Ht - H_pad)))
    b2 = jnp.pad(bias_p, ((0, 0), (0, Ht - H_pad)))
    r2 = jnp.pad(row_emb_p, ((0, 0), (0, Ht - H_pad)))

    grid = (M_pad // tm, Ht // th, Ht // th)
    cost = pl.CostEstimate(
        flops=2 * M_pad * Ht * Ht,
        transcendentals=0,
        bytes_accessed=int(M_pad * Ht * 4 * (Ht // th)     # x re-read per N tile
                           + M_pad * Ht * 4                # out
                           + Ht * Ht * 2 * (M_pad // tm)   # weight re-read per M tile
                           + M_pad * 4 + 2 * Ht * 4))
    ws_tiled = (2 * (tm * th * 4 + th * th * 2)            # x + weight double buffers
                + 2 * tm * th * 4                          # output buffers
                + 2 * tm * 4 + 4 * th * 4 + (2 << 20))
    out = pl.pallas_call(
        _adapter_tiled_kernel,
        out_shape=jax.ShapeDtypeStruct((M_pad, Ht), x.dtype),
        grid_spec=pltpu.PrefetchScalarGridSpec(
            num_scalar_prefetch=0,
            grid=grid,
            in_specs=[
                pl.BlockSpec((tm, th), lambda i, j, k: (i, k)),   # x (K slice)
                pl.BlockSpec((tm, 1), lambda i, j, k: (i, 0)),    # mask
                pl.BlockSpec((1, th), lambda i, j, k: (0, j)),    # row_emb (N slice)
                pl.BlockSpec((th, th), lambda i, j, k: (k, j)),   # weight tile
                pl.BlockSpec((1, th), lambda i, j, k: (0, j)),    # bias (N slice)
            ],
            out_specs=pl.BlockSpec((tm, th), lambda i, j, k: (i, j)),
        ),
        compiler_params=pltpu.CompilerParams(
            dimension_semantics=("parallel", "parallel", "arbitrary"),
            vmem_limit_bytes=int(min(ws_tiled + (16 << 20), (vmem_cap * 3) // 4)),
        ),
        cost_estimate=cost,
    )(x2, mask2, r2, w2, b2)
    return out[:M, :H].reshape(B, T, H)


# --------------------------------------------------------------------------- #
# Module
# --------------------------------------------------------------------------- #
class WaveformAdapterPallas:
    """JAX/Pallas port of the PyTorch WaveformAdapter."""

    def __init__(self, hidden_size, mask_time_prob, mask_time_length, key):
        self.hidden_size = hidden_size
        self.mask_time_prob = mask_time_prob
        self.mask_time_length = mask_time_length   # unused in forward (as in reference)
        k_w, k_b, k_e = jax.random.split(key, 3)
        bound = 1.0 / (hidden_size ** 0.5)
        # PyTorch Linear stores weight as (out, in); we store its transpose (in, out).
        w = jax.random.uniform(k_w, (hidden_size, hidden_size), jnp.float32, -bound, bound)
        b = jax.random.uniform(k_b, (hidden_size,), jnp.float32, -bound, bound)
        # torch.FloatTensor(hidden_size).uniform_() -> U[0, 1)
        emb = jax.random.uniform(k_e, (hidden_size,), jnp.float32, 0.0, 1.0)

        # Pad parameters once at init so the kernel always sees lane-dense (x128) tiles.
        h_pad = _round_up(hidden_size, 128)
        pad = h_pad - hidden_size
        self.hidden_pad = h_pad
        self.weight_bf16 = jnp.pad(w, ((0, pad), (0, pad))).astype(jnp.bfloat16)
        self.bias_p = jnp.pad(b, (0, pad)).reshape(1, h_pad)
        emb_p = jnp.pad(emb, (0, pad)).reshape(1, h_pad)
        # Precompute the masked-row result once: row_emb = bf16(emb) @ bf16(W) + b.
        self.row_emb_p = (
            jnp.matmul(emb_p.astype(jnp.bfloat16).astype(jnp.float32),
                       self.weight_bf16.astype(jnp.float32),
                       precision=jax.lax.Precision.HIGHEST)
            + self.bias_p).astype(jnp.float32)
        # f32 copies kept only for reference checking.
        self.weight_f32 = w
        self.bias_f32 = b
        self.mask_embedding_f32 = emb
        self.training = True

    def __call__(self, x, key, apply_mask=True):
        B, T, H = x.shape
        if apply_mask and self.training:
            # Bernoulli over x.shape[:-1], same semantics as the reference module.
            mask = jax.random.bernoulli(
                key, self.mask_time_prob, (B, T)).astype(jnp.float32)
        else:
            mask = jnp.zeros((B, T), jnp.float32)
        return waveform_adapter_forward(
            x, mask, self.row_emb_p, self.weight_bf16, self.bias_p)


def _reference(module, x, mask):
    """Plain-JAX reference using the same bf16-rounded operands as the kernel."""
    m = mask.astype(bool)
    xm = jnp.where(m[..., None], module.mask_embedding_f32[None, None, :], x)
    xm_b = xm.astype(jnp.bfloat16).astype(jnp.float32)
    w = module.weight_bf16[:module.hidden_size, :module.hidden_size].astype(jnp.float32)
    y = jnp.matmul(xm_b, w, precision=jax.lax.Precision.HIGHEST)
    return y + module.bias_f32


if __name__ == "__main__":
    key = jax.random.PRNGKey(0)
    (k_p1, k_x1, k_m1,
     k_p2, k_x2, k_m2,
     k_p3, k_x3, k_m3) = jax.random.split(key, 9)

    # --- small toy shape (resident-weight fast path) ----------------------
    B, T, H = 2, 8, 32
    module = WaveformAdapterPallas(hidden_size=H, mask_time_prob=0.5,
                                   mask_time_length=2, key=k_p1)
    x = jax.random.normal(k_x1, (B, T, H), jnp.float32)
    out = jax.block_until_ready(module(x, k_m1, apply_mask=True))
    mask = jax.random.bernoulli(k_m1, module.mask_time_prob, (B, T))
    ref = _reference(module, x, mask)
    assert out.shape == (B, T, H)
    assert jnp.allclose(out, ref, atol=1e-3, rtol=1e-3)

    # --- hidden not a multiple of 128, multiple M tiles (fast path) -------
    B2, T2, H2 = 2, 96, 200
    module2 = WaveformAdapterPallas(hidden_size=H2, mask_time_prob=0.3,
                                    mask_time_length=2, key=k_p2)
    x2 = jax.random.normal(k_x2, (B2, T2, H2), jnp.float32)
    out2 = jax.block_until_ready(module2(x2, k_m2, apply_mask=True))
    mask2 = jax.random.bernoulli(k_m2, module2.mask_time_prob, (B2, T2))
    ref2 = _reference(module2, x2, mask2)
    assert out2.shape == (B2, T2, H2)
    assert jnp.allclose(out2, ref2, atol=1e-3, rtol=1e-3)

    # --- forced tiled fallback path (exercises (M, N, K) accumulation) ----
    B3, T3, H3 = 2, 64, 320
    module3 = WaveformAdapterPallas(hidden_size=H3, mask_time_prob=0.4,
                                    mask_time_length=2, key=k_p3)
    x3 = jax.random.normal(k_x3, (B3, T3, H3), jnp.float32)
    mask3 = jax.random.bernoulli(k_m3, 0.4, (B3, T3)).astype(jnp.float32)
    out3 = jax.block_until_ready(waveform_adapter_forward(
        x3, mask3, module3.row_emb_p, module3.weight_bf16, module3.bias_p,
        force_tiled=True, tile_h=128))
    ref3 = _reference(module3, x3, mask3)
    assert out3.shape == (B3, T3, H3)
    assert jnp.allclose(out3, ref3, atol=1e-3, rtol=1e-3)

    print("KERNEL_OK")
</pallas_src>

<mosaic_0001>
module attributes {stable_mosaic.version = 11 : i64} {
  func.func @_adapter_resident_kernel(%arg0: i32, %arg1: memref<8x128xf32, #tpu.memory_space<vmem>>, %arg2: memref<8x1xf32, #tpu.memory_space<vmem>>, %arg3: memref<1x128xf32, #tpu.memory_space<vmem>>, %arg4: memref<128x128xbf16, #tpu.memory_space<vmem>>, %arg5: memref<1x128xf32, #tpu.memory_space<vmem>>, %arg6: memref<8x128xf32, #tpu.memory_space<vmem>>) attributes {dimension_semantics = [#tpu.dimension_semantics<parallel>], iteration_bounds = array<i64: 2>, scalar_prefetch = 0 : i64, scratch_operands = 0 : i64, tpu.core_type = #tpu.core_type<tc>, window_params = [{transform_indices = @transform_0, window_bounds = array<i64: 8, 128>}, {transform_indices = @transform_1, window_bounds = array<i64: 8, 1>}, {pipeline_mode = #tpu.pipeline_mode<synchronous>, transform_indices = @transform_2, window_bounds = array<i64: 1, 128>}, {pipeline_mode = #tpu.pipeline_mode<synchronous>, transform_indices = @transform_3, window_bounds = array<i64: 128, 128>}, {pipeline_mode = #tpu.pipeline_mode<synchronous>, transform_indices = @transform_4, window_bounds = array<i64: 1, 128>}, {transform_indices = @transform_5, window_bounds = array<i64: 8, 128>}]} {
    %c0 = arith.constant 0 : index
    %c0_0 = arith.constant 0 : index
    %0 = vector.load %arg1[%c0, %c0_0] : memref<8x128xf32, #tpu.memory_space<vmem>>, vector<8x128xf32>
    %1 = arith.truncf %0 : vector<8x128xf32> to vector<8x128xbf16>
    %c0_1 = arith.constant 0 : index
    %c0_2 = arith.constant 0 : index
    %2 = vector.load %arg4[%c0_1, %c0_2] : memref<128x128xbf16, #tpu.memory_space<vmem>>, vector<128x128xbf16>
    %cst = arith.constant dense<0.000000e+00> : vector<8x128xf32>
    %3 = tpu.matmul %1, %2, %cst {dimension_numbers = #tpu.dot_dimension_numbers<[1], [0], [0], [1], [0, 0, 1, 1], [], []>} : vector<8x128xbf16>, vector<128x128xbf16>, vector<8x128xf32> -> vector<8x128xf32>
    %c0_3 = arith.constant 0 : index
    %c0_4 = arith.constant 0 : index
    %4 = vector.load %arg5[%c0_3, %c0_4] : memref<1x128xf32, #tpu.memory_space<vmem>>, vector<1x128xf32>
    %5 = vector.broadcast %4 : vector<1x128xf32> to vector<8x128xf32>
    %6 = arith.addf %3, %5 : vector<8x128xf32>
    %c0_5 = arith.constant 0 : index
    %c0_6 = arith.constant 0 : index
    %7 = vector.load %arg2[%c0_5, %c0_6] : memref<8x1xf32, #tpu.memory_space<vmem>>, vector<8x1xf32>
    %cst_7 = arith.constant 5.000000e-01 : f32
    %8 = vector.broadcast %cst_7 : f32 to vector<8x1xf32>
    %9 = arith.cmpf ogt, %7, %8 : vector<8x1xf32>
    %c0_8 = arith.constant 0 : index
    %c0_9 = arith.constant 0 : index
    %10 = vector.load %arg3[%c0_8, %c0_9] : memref<1x128xf32, #tpu.memory_space<vmem>>, vector<1x128xf32>
    %11 = vector.shape_cast %9 : vector<8x1xi1> to vector<8x1xi1>
    %12 = vector.broadcast %11 : vector<8x1xi1> to vector<8x128xi1>
    %13 = vector.shape_cast %10 : vector<1x128xf32> to vector<1x128xf32>
    %14 = vector.broadcast %13 : vector<1x128xf32> to vector<8x128xf32>
    %15 = arith.select %12, %14, %6 : vector<8x128xi1>, vector<8x128xf32>
    %c0_10 = arith.constant 0 : index
    %c0_11 = arith.constant 0 : index
    %16 = vector.load %arg6[%c0_10, %c0_11] : memref<8x128xf32, #tpu.memory_space<vmem>>, vector<8x128xf32>
    tpu.vector_store %arg6[%c0_10, %c0_11], %15 {strides = array<i32>} : memref<8x128xf32, #tpu.memory_space<vmem>>, vector<8x128xf32>,
    return
  }
  func.func @transform_0(%arg0: i32) -> (i32, i32) {
    %c0_i32 = arith.constant 0 : i32
    %c0_i32_0 = arith.constant 0 : i32
    return %arg0, %c0_i32 : i32, i32
  }
  func.func @transform_1(%arg0: i32) -> (i32, i32) {
    %c0_i32 = arith.constant 0 : i32
    %c0_i32_0 = arith.constant 0 : i32
    return %arg0, %c0_i32 : i32, i32
  }
  func.func @transform_2(%arg0: i32) -> (i32, i32) {
    %c0_i32 = arith.constant 0 : i32
    %c0_i32_0 = arith.constant 0 : i32
    %c0_i32_1 = arith.constant 0 : i32
    return %c0_i32, %c0_i32_0 : i32, i32
  }
  func.func @transform_3(%arg0: i32) -> (i32, i32) {
    %c0_i32 = arith.constant 0 : i32
    %c0_i32_0 = arith.constant 0 : i32
    %c0_i32_1 = arith.constant 0 : i32
    return %c0_i32, %c0_i32_0 : i32, i32
  }
  func.func @transform_4(%arg0: i32) -> (i32, i32) {
    %c0_i32 = arith.constant 0 : i32
    %c0_i32_0 = arith.constant 0 : i32
    %c0_i32_1 = arith.constant 0 : i32
    return %c0_i32, %c0_i32_0 : i32, i32
  }
  func.func @transform_5(%arg0: i32) -> (i32, i32) {
    %c0_i32 = arith.constant 0 : i32
    %c0_i32_0 = arith.constant 0 : i32
    return %arg0, %c0_i32 : i32, i32
  }
}

</mosaic_0001>

<llo_original>
// kernel: tpu_custom_call.1
$region0: #{tpu_custom_call.1}
  #allocation0 [shape = 'u32[]', space=smem, size = 0x4, offset = 0x4, fixed_abs, tag = 'smem constant byte address 0x4 - core index']
  #allocation1 [shape = 'u32[144,128]{1,0:T(1,128)}', space=vmem, size = 0x12000, scoped, tag = 'internal scratch']
  %s0 = inlined_call_operand.vmem [shape: f32[16,128], index: 0, kind: input, shape index: {}]
  %s1 = inlined_call_operand.vmem [shape: f32[16,1], index: 1, kind: input, shape index: {}]
  %s2 = inlined_call_operand.vmem [shape: f32[1,128], index: 2, kind: input, shape index: {}]
  %s3 = inlined_call_operand.hbm [shape: bf16[128,128], index: 3, kind: input, shape index: {}]
  %s4 = inlined_call_operand.vmem [shape: f32[1,128], index: 4, kind: input, shape index: {}]
  %s5 = inlined_call_operand.hbm [shape: f32[16,128], index: 5, kind: output, shape index: {}]
  %s6 = sld [smem:[#allocation0]]
  $region57: #{tpu_custom_call.1} parent=0
    _
  %s8 = ssub.s32 1, %s6
  %s9 = scalar_select 0, %s8, %s6
  $region1: #{tpu_custom_call.1} parent=0
    #allocation2 [shape = 'u8[32768]{0}', space=vmem, size = 0x8000, scoped, tag = 'input window, operand 3, single buffered']
    #allocation3 [shape = 's32[2]{0}', space=sflag, size = 0x8, scoped, tag = 'scoped memory for tpu_custom_call.1']
    #allocation4 [shape = 's32[2]{0}', space=sflag, size = 0x8, scoped, tag = 'scoped memory for tpu_custom_call.1']
    #allocation5 [shape = 'u8[8192]{0}', space=vmem, size = 0x2000, scoped, tag = 'output window, operand 0']
    %10 = vsyncpa [#allocation3], 0
    %11 = vsyncpa [#allocation4], 0
    %s12 = scalar_lea.sflag [#allocation4], 1
    %13 = vsyncpa %s12, 0
    loop: start=0, step=1, limit=4
    $region2: #{tpu_custom_call.1} parent=1 // loop_pre_header
      _
    $region3: #{tpu_custom_call.1} parent=1 // loop_header
      %s15 = sphi 0, %s19
      %p16 = scmp.ge.s32.totalorder %s15, 4
      %s25 = sphi 0, %s27
      %s28 = sphi 0, %s25
      %s29 = sphi 0, %s28
      %s45 = sphi 0, %s29
      %s51 = sphi 0, %s53
      %s54 = sphi 0, %s51
      %s55 = sphi 0, %s54
      %s71 = sphi 0, %s55
      %s75 = sphi 0, %s75
      %s77 = sphi 0, %s75
      %s78 = sphi 0, %s77
      %s92 = sphi 0, %s78
      %s96 = sphi 0, %s96
      %s98 = sphi 0, %s96
      %s99 = sphi 0, %s98
      %s113 = sphi 0, %s99
      %s117 = sphi 0, %s117
      %s119 = sphi 0, %s117
      %s120 = sphi 0, %s119
      %s134 = sphi 0, %s120
      %s140 = sphi 0, %s142
      %s143 = sphi 0, %s140
      %s144 = sphi 0, %s143
      %s160 = sphi 0, %s144
    $region4: #{tpu_custom_call.1} parent=1 // loop_header_branch
      %18 = sbr.rel (%p16) target = $region8
    $region5: #{tpu_custom_call.1} parent=1 // loop_body
      %s20 = ssub.s32 %s15, 1
      %s21 = ssub.s32 %s15, 2
      %s22 = sadd.s32 %s15, 1
      %s23 = ssub.s32 %s15, %s22
      %p24 = scmp.eq.s32.totalorder %s23, 0
      %s26 = sadd.s32 %s25, 1
      %s27 = scalar_select %p24, %s25, %s26
      %p30 = pneg %p24
      %p31 = scmp.eq.s32.totalorder %s15, 1
      %p32 = por %p30, %p31
      %p33 = scmp.ne.s32.totalorder %s25, %s28
      %p34 = scmp.eq.s32.totalorder %s15, 0
      %p35 = por %p33, %p34
      %p36 = scmp.ne.s32.totalorder %s25, %s28
      %p37 = scmp.eq.s32.totalorder %s20, 1
      %p38 = por %p36, %p37
      %p39 = scmp.ne.s32.totalorder %s28, %s29
      %p40 = scmp.eq.s32.totalorder %s20, 0
      %p41 = por %p39, %p40
      %p42 = scmp.ne.s32.totalorder %s28, %s29
      %p43 = scmp.eq.s32.totalorder %s21, 1
      %p44 = por %p42, %p43
      %p46 = scmp.ne.s32.totalorder %s29, %s45
      %p47 = scmp.eq.s32.totalorder %s21, 0
      %p48 = por %p46, %p47
      %s49 = ssub.s32 %s15, %s22
      %p50 = scmp.eq.s32.totalorder %s49, 0
      %s52 = sadd.s32 %s51, 1
      %s53 = scalar_select %p50, %s51, %s52
      %p56 = pneg %p50
      %p57 = scmp.eq.s32.totalorder %s15, 1
      %p58 = por %p56, %p57
      %p59 = scmp.ne.s32.totalorder %s51, %s54
      %p60 = scmp.eq.s32.totalorder %s15, 0
      %p61 = por %p59, %p60
      %p62 = scmp.ne.s32.totalorder %s51, %s54
      %p63 = scmp.eq.s32.totalorder %s20, 1
      %p64 = por %p62, %p63
      %p65 = scmp.ne.s32.totalorder %s54, %s55
      %p66 = scmp.eq.s32.totalorder %s20, 0
      %p67 = por %p65, %p66
      %p68 = scmp.ne.s32.totalorder %s54, %s55
      %p69 = scmp.eq.s32.totalorder %s21, 1
      %p70 = por %p68, %p69
      %p72 = scmp.ne.s32.totalorder %s55, %s71
      %p73 = scmp.eq.s32.totalorder %s21, 0
      %p74 = por %p72, %p73
      %s76 = sadd.s32 %s75, 1
      %p79 = scmp.eq.s32.totalorder %s15, 1
      %p80 = scmp.ne.s32.totalorder %s75, %s77
      %p81 = scmp.eq.s32.totalorder %s15, 0
      %p82 = por %p80, %p81
      %p83 = scmp.ne.s32.totalorder %s75, %s77
      %p84 = scmp.eq.s32.totalorder %s20, 1
      %p85 = por %p83, %p84
      %p86 = scmp.ne.s32.totalorder %s77, %s78
      %p87 = scmp.eq.s32.totalorder %s20, 0
      %p88 = por %p86, %p87
      %p89 = scmp.ne.s32.totalorder %s77, %s78
      %p90 = scmp.eq.s32.totalorder %s21, 1
      %p91 = por %p89, %p90
      %p93 = scmp.ne.s32.totalorder %s78, %s92
      %p94 = scmp.eq.s32.totalorder %s21, 0
      %p95 = por %p93, %p94
      %s97 = sadd.s32 %s96, 1
      %p100 = scmp.eq.s32.totalorder %s15, 1
      %p101 = scmp.ne.s32.totalorder %s96, %s98
      %p102 = scmp.eq.s32.totalorder %s15, 0
      %p103 = por %p101, %p102
      %p104 = scmp.ne.s32.totalorder %s96, %s98
      %p105 = scmp.eq.s32.totalorder %s20, 1
      %p106 = por %p104, %p105
      %p107 = scmp.ne.s32.totalorder %s98, %s99
      %p108 = scmp.eq.s32.totalorder %s20, 0
      %p109 = por %p107, %p108
      %p110 = scmp.ne.s32.totalorder %s98, %s99
      %p111 = scmp.eq.s32.totalorder %s21, 1
      %p112 = por %p110, %p111
      %p114 = scmp.ne.s32.totalorder %s99, %s113
      %p115 = scmp.eq.s32.totalorder %s21, 0
      %p116 = por %p114, %p115
      %s118 = sadd.s32 %s117, 1
      %p121 = scmp.eq.s32.totalorder %s15, 1
      %p122 = scmp.ne.s32.totalorder %s117, %s119
      %p123 = scmp.eq.s32.totalorder %s15, 0
      %p124 = por %p122, %p123
      %p125 = scmp.ne.s32.totalorder %s117, %s119
      %p126 = scmp.eq.s32.totalorder %s20, 1
      %p127 = por %p125, %p126
      %p128 = scmp.ne.s32.totalorder %s119, %s120
      %p129 = scmp.eq.s32.totalorder %s20, 0
      %p130 = por %p128, %p129
      %p131 = scmp.ne.s32.totalorder %s119, %s120
      %p132 = scmp.eq.s32.totalorder %s21, 1
      %p133 = por %p131, %p132
      %p135 = scmp.ne.s32.totalorder %s120, %s134
      %p136 = scmp.eq.s32.totalorder %s21, 0
      %p137 = por %p135, %p136
      %s138 = ssub.s32 %s15, %s22
      %p139 = scmp.eq.s32.totalorder %s138, 0
      %s141 = sadd.s32 %s140, 1
      %s142 = scalar_select %p139, %s140, %s141
      %p145 = pneg %p139
      %p146 = scmp.eq.s32.totalorder %s15, 1
      %p147 = por %p145, %p146
      %p148 = scmp.ne.s32.totalorder %s140, %s143
      %p149 = scmp.eq.s32.totalorder %s15, 0
      %p150 = por %p148, %p149
      %p151 = scmp.ne.s32.totalorder %s140, %s143
      %p152 = scmp.eq.s32.totalorder %s20, 1
      %p153 = por %p151, %p152
      %p154 = scmp.ne.s32.totalorder %s143, %s144
      %p155 = scmp.eq.s32.totalorder %s20, 0
      %p156 = por %p154, %p155
      %p157 = scmp.ne.s32.totalorder %s143, %s144
      %p158 = scmp.eq.s32.totalorder %s21, 1
      %p159 = por %p157, %p158
      %p161 = scmp.ne.s32.totalorder %s144, %s160
      %p162 = scmp.eq.s32.totalorder %s21, 0
      %p163 = por %p161, %p162
      %p164 = scmp.le.s32.totalorder 1, %s15
      %p165 = scmp.lt.s32.totalorder %s15, 3
      %p166 = pnand %p164, %p165
      %p167 = pneg %p166
      // Predicated region
      $region9: #{tpu_custom_call.1} parent=5 // pred_check
        _
      $region10: #{tpu_custom_call.1} parent=5 // pred_check_branch
        %169 = sbr.rel (%p166) target = $region12
      $region11: #{tpu_custom_call.1} parent=5 // pred_region
        %s170 = ssub.s32 %s15, 1
        // Predicated region
        $region13: #{tpu_custom_call.1} parent=11 // pred_check
          %p171 = pneg %p88
        $region14: #{tpu_custom_call.1} parent=11 // pred_check_branch
          %173 = sbr.rel (%p171) target = $region16
        $region15: #{tpu_custom_call.1} parent=11 // pred_region
          _
        $region16: #{tpu_custom_call.1} parent=11 // pred_fallthru
          _
        // Predicated region
        $region17: #{tpu_custom_call.1} parent=11 // pred_check
          %p174 = pneg %p109
        $region18: #{tpu_custom_call.1} parent=11 // pred_check_branch
          %176 = sbr.rel (%p174) target = $region20
        $region19: #{tpu_custom_call.1} parent=11 // pred_region
          %s178 = ssub.s32 1024, 1024
          %179 = vsyncadd [#allocation3], %s178
          %s180 = sshll.u32 [#allocation2], 4
          %s181 = int_to_ptr.vmem [resolvable:$true] %s180
          %186 = dma.hbm_to_vmem [thread:$0]  %s3, 1024, %s181, [#allocation3], 64, 64, 4
        $region20: #{tpu_custom_call.1} parent=11 // pred_fallthru
          _
        // Predicated region
        $region21: #{tpu_custom_call.1} parent=11 // pred_check
          %p187 = pneg %p130
        $region22: #{tpu_custom_call.1} parent=11 // pred_check_branch
          %189 = sbr.rel (%p187) target = $region24
        $region23: #{tpu_custom_call.1} parent=11 // pred_region
          _
        $region24: #{tpu_custom_call.1} parent=11 // pred_fallthru
          _
      $region12: #{tpu_custom_call.1} parent=5 // pred_fallthru
        _
      %p190 = scmp.lt.s32.totalorder %s15, 2
      // Predicated region
      $region25: #{tpu_custom_call.1} parent=5 // pred_check
        %p191 = pneg %p190
      $region26: #{tpu_custom_call.1} parent=5 // pred_check_branch
        %193 = sbr.rel (%p191) target = $region28
      $region27: #{tpu_custom_call.1} parent=5 // pred_region
        // Predicated region
        $region29: #{tpu_custom_call.1} parent=27 // pred_check
          %p194 = pneg %p35
        $region30: #{tpu_custom_call.1} parent=27 // pred_check_branch
          %196 = sbr.rel (%p194) target = $region32
        $region31: #{tpu_custom_call.1} parent=27 // pred_region
          %p197 = scmp.lt.s32.totalorder %s15, 1
          %s198 = scalar_select %p197, %s15, 1
          %s199 = smul.addr %s198, 8
          %s200 = scalar_lea.vmem %s0, %s199
        $region32: #{tpu_custom_call.1} parent=27 // pred_fallthru
          _
        // Predicated region
        $region33: #{tpu_custom_call.1} parent=27 // pred_check
          %p201 = pneg %p61
        $region34: #{tpu_custom_call.1} parent=27 // pred_check_branch
          %203 = sbr.rel (%p201) target = $region36
        $region35: #{tpu_custom_call.1} parent=27 // pred_region
          %p204 = scmp.lt.s32.totalorder %s15, 1
          %s205 = scalar_select %p204, %s15, 1
          %s206 = smul.addr %s205, 8
          %s207 = scalar_lea.vmem %s1, %s206
        $region36: #{tpu_custom_call.1} parent=27 // pred_fallthru
          _
      $region28: #{tpu_custom_call.1} parent=5 // pred_fallthru
        _
      %p208 = scmp.le.s32.totalorder 1, %s15
      %p209 = scmp.lt.s32.totalorder %s15, 3
      %p210 = pnand %p208, %p209
      %p211 = pneg %p210
      // Predicated region
      $region37: #{tpu_custom_call.1} parent=5 // pred_check
        _
      $region38: #{tpu_custom_call.1} parent=5 // pred_check_branch
        %213 = sbr.rel (%p210) target = $region40
      $region39: #{tpu_custom_call.1} parent=5 // pred_region
        %s214 = ssub.s32 %s15, 1
        // Predicated region
        $region41: #{tpu_custom_call.1} parent=39 // pred_check
          %p215 = pneg %p109
        $region42: #{tpu_custom_call.1} parent=39 // pred_check_branch
          %217 = sbr.rel (%p215) target = $region44
        $region43: #{tpu_custom_call.1} parent=39 // pred_region
          %218 = dma.done [#allocation3], 1024
        $region44: #{tpu_custom_call.1} parent=39 // pred_fallthru
          _
        %p219 = scmp.lt.s32.totalorder %s20, 1
        %s220 = scalar_select %p219, %s20, 1
        %s221 = smul.addr %s220, 8
        %s222 = scalar_lea.vmem %s0, %s221
        %p223 = pneg %p41
        %p224 = pneg %p38
        %p225 = scmp.lt.s32.totalorder %s20, 1
        %s226 = scalar_select %p225, %s20, 1
        %s227 = smul.addr %s226, 8
        %s228 = scalar_lea.vmem %s1, %s227
        %p229 = pneg %p67
        %p230 = pneg %p64
        %p231 = pneg %p88
        %p232 = pneg %p85
        %p233 = pneg %p109
        %p234 = pneg %p106
        %p235 = pneg %p130
        %p236 = pneg %p127
        %p237 = pneg %p156
        %p238 = pneg %p153
        %s239 = sand.u32 %s143, 1
        %s240 = scalar_lea.sflag [#allocation4], %s239
        %s241 = sand.u32 %s143, 1
        %s242 = smul.addr %s241, 8
        %s243 = scalar_lea.vmem [#allocation5], %s242
        %p244 = scmp.lt.s32.totalorder %s20, 1
        %s245 = scalar_select %p244, %s20, 1
        %s246 = smul.addr %s245, 8
        %s247 = scalar_lea.vmem %s0, %s246
        %p248 = scmp.lt.s32.totalorder %s20, 1
        %s249 = scalar_select %p248, %s20, 1
        %s250 = smul.addr %s249, 8
        %s251 = scalar_lea.vmem %s1, %s250
        %v253 = vld [vmem:[%s247] sm:$0xff]
        %v254 = vpack.c.bf16 %v253, %v253
        %v255 = vld [vmem:[#allocation2] sm:$0xf]
        %v256 = vld [vmem:[#allocation2 + $0x4] sm:$0xf]
        %v257 = vld [vmem:[#allocation2 + $0x8] sm:$0xf]
        %v258 = vld [vmem:[#allocation2 + $0xc] sm:$0xf]
        %v259 = vld [vmem:[#allocation2 + $0x10] sm:$0xf]
        %v260 = vld [vmem:[#allocation2 + $0x14] sm:$0xf]
        %v261 = vld [vmem:[#allocation2 + $0x18] sm:$0xf]
        %v262 = vld [vmem:[#allocation2 + $0x1c] sm:$0xf]
        %v263 = vld [vmem:[#allocation2 + $0x20] sm:$0xf]
        %v264 = vld [vmem:[#allocation2 + $0x24] sm:$0xf]
        %v265 = vld [vmem:[#allocation2 + $0x28] sm:$0xf]
        %v266 = vld [vmem:[#allocation2 + $0x2c] sm:$0xf]
        %v267 = vld [vmem:[#allocation2 + $0x30] sm:$0xf]
        %v268 = vld [vmem:[#allocation2 + $0x34] sm:$0xf]
        %v269 = vld [vmem:[#allocation2 + $0x38] sm:$0xf]
        %v270 = vld [vmem:[#allocation2 + $0x3c] sm:$0xf]
        %v271 = vld [vmem:[%s4] sm:$0x1]
        %v273 = vlaneseq
        %v274 = vshrl.u32 %v273, 7
        %v275 = vsub.s32 0, %v274
        %v276 = vrot.slane %v271, %v275
        %v294 = vunpack.c.l.b16 %v255
        %v295 = vunpack.c.l.b16 %v256
        %v296 = vunpack.c.l.b16 %v257
        %v297 = vunpack.c.l.b16 %v258
        %v298 = vunpack.c.l.b16 %v259
        %v299 = vunpack.c.l.b16 %v260
        %v300 = vunpack.c.l.b16 %v261
        %v301 = vunpack.c.l.b16 %v262
        %v302 = vunpack.c.l.b16 %v263
        %v303 = vunpack.c.l.b16 %v264
        %v304 = vunpack.c.l.b16 %v265
        %v305 = vunpack.c.l.b16 %v266
        %v306 = vunpack.c.l.b16 %v267
        %v307 = vunpack.c.l.b16 %v268
        %v308 = vunpack.c.l.b16 %v269
        %v309 = vunpack.c.l.b16 %v270
        %v310 = vpack.c.b16 %v295, %v294
        %v311 = vpack.c.b16 %v297, %v296
        %v312 = vpack.c.b16 %v299, %v298
        %v313 = vpack.c.b16 %v301, %v300
        %v314 = vpack.c.b16 %v303, %v302
        %v315 = vpack.c.b16 %v305, %v304
        %v316 = vpack.c.b16 %v307, %v306
        %v317 = vpack.c.b16 %v309, %v308
        %326 = vmatprep.subr.bf16.mxu0 0
        %327 = vmatpush1.bf16.msra.mxu0 %v310
        %328 = vmatprep.subr.bf16.mxu0 0
        %329 = vmatpush1.bf16.msra.mxu0 %v311
        %330 = vmatprep.subr.bf16.mxu0 0
        %331 = vmatpush1.bf16.msra.mxu0 %v312
        %332 = vmatprep.subr.bf16.mxu0 0
        %333 = vmatpush1.bf16.msra.mxu0 %v313
        %334 = vmatprep.subr.bf16.mxu0 0
        %335 = vmatpush1.bf16.msra.mxu0 %v314
        %336 = vmatprep.subr.bf16.mxu0 0
        %337 = vmatpush1.bf16.msra.mxu0 %v315
        %338 = vmatprep.subr.bf16.mxu0 0
        %339 = vmatpush1.bf16.msra.mxu0 %v316
        %340 = vmatprep.subr.bf16.mxu0 0
        %341 = vmatpush1.bf16.msra.mxu0 %v317
        %342 = vmatprep.subr.bf16.mxu0 0
        %343 = vmatpush1.bf16.msra.mxu0 0
        %344 = vmatprep.subr.bf16.mxu0 0
        %345 = vmatpush1.bf16.msra.mxu0 0
        %346 = vmatprep.subr.bf16.mxu0 0
        %347 = vmatpush1.bf16.msra.mxu0 0
        %348 = vmatprep.subr.bf16.mxu0 0
        %349 = vmatpush1.bf16.msra.mxu0 0
        %350 = vmatprep.subr.bf16.mxu0 0
        %351 = vmatpush1.bf16.msra.mxu0 0
        %352 = vmatprep.subr.bf16.mxu0 0
        %353 = vmatpush1.bf16.msra.mxu0 0
        %354 = vmatprep.subr.bf16.mxu0 0
        %355 = vmatpush1.bf16.msra.mxu0 0
        %356 = vmatprep.subr.bf16.mxu0 0
        %357 = vmatpush1.bf16.msra.mxu0 0
        %358 = vmatprep.mubr.bf16.mxu0 0
        %359 = vmatmul.mubr.bf16.gmra.mrb[0].mxu0 %v254
        %v360 = vpop.f32.mrb[0].mxu0
        %v361 = vadd.f32 %v276, %v360
        %v362 = vpop.f32.mrb[0].mxu0
        %v363 = vpop.f32.mrb[0].mxu0
        %v364 = vpop.f32.mrb[0].mxu0
        %365 = vdwg.mxu0
        %v366 = vld [vmem:[%s251] sm:$0xff]
        %vm367 = vcmp.gt.f32.partialorder %v366, 0.5
        %v368 = vld [vmem:[%s2] sm:$0x1]
        %v369 = vsel %vm367, 1, 0
        %370 = vset.pattern.permute.xlu0 0
        %371 = vperm.xlu0 %370, %v369
        %v372 = vpop.permute.xlu0 %371
        %vm373 = vcmp.eq.s32.totalorder %v372, 1
        %v375 = vlaneseq
        %v376 = vshrl.u32 %v375, 7
        %v377 = vsub.s32 0, %v376
        %v378 = vrot.slane %v368, %v377
        %v380 = vsel %vm373, %v378, %v361
        %381 = vst [vmem:[%s243] sm:$0xff] %v380
        %s382 = sand.u32 %s143, 1
        %s383 = scalar_lea.sflag [#allocation4], %s382
        %s384 = sand.u32 %s143, 1
        %s385 = smul.addr %s384, 8
        %s386 = scalar_lea.vmem [#allocation5], %s385
        // Predicated region
        $region45: #{tpu_custom_call.1} parent=39 // pred_check
          %p387 = pneg %p153
        $region46: #{tpu_custom_call.1} parent=39 // pred_check_branch
          %389 = sbr.rel (%p387) target = $region48
        $region47: #{tpu_custom_call.1} parent=39 // pred_region
          %s391 = ssub.s32 128, 128
          %392 = vsyncadd %s383, %s391
          %s393 = smul.addr %s20, 128
          %s394 = scalar_lea.hbm %s5, %s393
          %s396 = sshll.u32 %s386, 4
          %s397 = int_to_ptr.vmem [resolvable:$true] %s396
          %399 = dma.vmem_to_hbm [thread:$0]  %s397, 128, %s394, %s383
        $region48: #{tpu_custom_call.1} parent=39 // pred_fallthru
          _
      $region40: #{tpu_custom_call.1} parent=5 // pred_fallthru
        _
      %p400 = scmp.le.s32.totalorder 2, %s15
      // Predicated region
      $region49: #{tpu_custom_call.1} parent=5 // pred_check
        %p401 = pneg %p400
      $region50: #{tpu_custom_call.1} parent=5 // pred_check_branch
        %403 = sbr.rel (%p401) target = $region52
      $region51: #{tpu_custom_call.1} parent=5 // pred_region
        %s404 = ssub.s32 %s15, 2
        // Predicated region
        $region53: #{tpu_custom_call.1} parent=51 // pred_check
          %p405 = pneg %p159
        $region54: #{tpu_custom_call.1} parent=51 // pred_check_branch
          %407 = sbr.rel (%p405) target = $region56
        $region55: #{tpu_custom_call.1} parent=51 // pred_region
          %s408 = sand.u32 %s144, 1
          %s409 = scalar_lea.sflag [#allocation4], %s408
          %s410 = sand.u32 %s144, 1
          %s411 = smul.addr %s410, 8
          %s412 = scalar_lea.vmem [#allocation5], %s411
          %413 = dma.done %s409, 128
        $region56: #{tpu_custom_call.1} parent=51 // pred_fallthru
          _
      $region52: #{tpu_custom_call.1} parent=5 // pred_fallthru
        _
    $region6: #{tpu_custom_call.1} parent=1 // loop_footer
      %s19 = sadd.s32 1, %s15
    $region7: #{tpu_custom_call.1} parent=1 // loop_footer_branch
      %14 = sbr.rel target = $region3
    $region8: #{tpu_custom_call.1} parent=1 // loop_exit
      _
    %414 = vsyncpa [#allocation3], 1
    %s415 = scalar_lea.sflag [#allocation3], 1
    %416 = vsyncpa %s415, 1
    %417 = vsyncpa [#allocation4], 1
    %s418 = scalar_lea.sflag [#allocation4], 1
    %419 = vsyncpa %s418, 1

</llo_original>
